<compile_context>
chip_gen: v6e
topology: v6e:2x2x1
jax: 0.10.0
libtpu: 0.0.40
codegen_flags: <defaults>
</compile_context>

<pallas_src>
import jax
import jax.numpy as jnp
from jax.experimental import pallas as pl
from jax.experimental.pallas import tpu as pltpu

_LANES = 128
_SUBLANES = 8
_HARD_CAP_ROWS = 4096  # 6*4096*128*4B = 12.6 MiB double-buffered; fits all gens


def _repeat2_kernel(x_ref, o_ref):
    # x_ref : (tm, 128)      lane-dense input tile
    # o_ref : (2, tm, 128)   both repeated copies of that tile
    v = x_ref[...]
    o_ref[0, :, :] = v  # copy #1
    o_ref[1, :, :] = v  # copy #2   (1 read, 2 writes -> minimal 3N HBM bytes)


def _choose_tile_rows(rows, max_tile_rows):
    """Row tile: multiple of 8 sublanes, VMEM-safe, >=2 grid steps when possible."""
    if rows <= _SUBLANES:
        return rows  # full extent (allowed even when < 8)
    tm = min(max_tile_rows, _HARD_CAP_ROWS, rows)
    tm = max(_SUBLANES, (tm // _SUBLANES) * _SUBLANES)
    if rows >= 2 * _SUBLANES:
        # Guarantee at least 2 grid steps so dimension_semantics=("parallel",)
        # actually shards the copy across v7x's two TensorCores.
        half = max(_SUBLANES, (((rows + 1) // 2) // _SUBLANES) * _SUBLANES)
        tm = min(tm, half)
    return tm


def _repeat2_slab(slab, max_tile_rows):
    """slab: (rows, 128) -> (2, rows, 128) with out[0] == out[1] == slab."""
    rows, lanes = slab.shape
    assert lanes == _LANES
    itemsize = jnp.dtype(slab.dtype).itemsize

    tm = _choose_tile_rows(rows, max_tile_rows)
    grid = ((rows + tm - 1) // tm,)  # last block may overhang; OOB writes dropped

    # Double-buffered footprint: 2 input bufs (tm,128) + 2 output bufs (2,tm,128).
    footprint = 6 * tm * _LANES * itemsize
    vmem_limit = min(max(int(footprint * 1.5), 4 * 1024 * 1024), 64 * 1024 * 1024)

    return pl.pallas_call(
        _repeat2_kernel,
        out_shape=jax.ShapeDtypeStruct((2, rows, _LANES), slab.dtype),
        grid=grid,
        in_specs=[pl.BlockSpec((tm, _LANES), lambda i: (i, 0))],
        out_specs=pl.BlockSpec((2, tm, _LANES), lambda i: (0, i, 0)),
        compiler_params=pltpu.CompilerParams(
            dimension_semantics=("parallel",),
            vmem_limit_bytes=vmem_limit,
        ),
    )(slab)


def repeat_view(x, *, max_tile_rows=2048):
    """x: (B, C, D) -> (2, B*C, D), i.e. x.repeat(2, 1, 1).view(2, B*C, D)."""
    B, C, D = x.shape
    BC = B * C
    N = BC * D
    flat = x.reshape(N)  # contiguous row-major: zero-copy

    rows_full, rem = divmod(N, _LANES)

    if rem == 0:
        # Fast path: fully lane-aligned.  Reshapes are bitcasts; kernel traffic
        # (3N bytes) is the only HBM traffic end to end.
        out = _repeat2_slab(flat.reshape(rows_full, _LANES), max_tile_rows)
        return out.reshape(2, BC, D)

    if rows_full == 0:
        # Tiny input (< 128 elements): pad a single 128-lane row (sub-KiB glue),
        # still exercise the kernel.
        slab = jnp.pad(flat, (0, _LANES - rem)).reshape(1, _LANES)
        out = _repeat2_slab(slab, max_tile_rows).reshape(2, _LANES)
        return out[:, :N].reshape(2, BC, D)

    # Misaligned N: bulk 128-aligned prefix through the kernel (no whole-array
    # padding), the < 128-element tail via plain jnp, one concat.
    split = rows_full * _LANES
    main = flat[:split].reshape(rows_full, _LANES)
    tail = flat[split:]
    out_main = _repeat2_slab(main, max_tile_rows).reshape(2, split)
    out_tail = jnp.broadcast_to(tail[None, :], (2, rem))
    return jnp.concatenate([out_main, out_tail], axis=1).reshape(2, BC, D)


if __name__ == "__main__":
    key = jax.random.PRNGKey(0)
    k1, k2, k3 = jax.random.split(key, 3)

    # Case 1: the original PyTorch shape (2, 3, 4) -> tiny single-row kernel path.
    x1 = jax.random.normal(k1, (2, 3, 4), dtype=jnp.float32)
    z1 = jax.block_until_ready(repeat_view(x1))
    ref1 = jnp.stack([x1.reshape(6, 4)] * 2, axis=0)
    assert z1.shape == (2, 6, 4), z1.shape
    assert jnp.array_equal(z1, ref1), "mismatch vs reference (tiny case)"

    # Case 2: lane-aligned fast path (N % 128 == 0), multi-step parallel grid.
    x2 = jax.random.normal(k2, (4, 8, 128), dtype=jnp.float32)
    z2 = jax.block_until_ready(repeat_view(x2))
    ref2 = jnp.stack([x2.reshape(32, 128)] * 2, axis=0)
    assert z2.shape == (2, 32, 128), z2.shape
    assert jnp.array_equal(z2, ref2), "mismatch vs reference (aligned case)"

    # Case 3: misaligned N (bulk kernel + tiny jnp tail) with a ragged last tile.
    x3 = jax.random.normal(k3, (3, 50, 20), dtype=jnp.float32)
    z3 = jax.block_until_ready(repeat_view(x3, max_tile_rows=8))
    ref3 = jnp.stack([x3.reshape(150, 20)] * 2, axis=0)
    assert z3.shape == (2, 150, 20), z3.shape
    assert jnp.array_equal(z3, ref3), "mismatch vs reference (misaligned case)"

    print("KERNEL_OK")
</pallas_src>

<mosaic_0001>
module attributes {stable_mosaic.version = 11 : i64} {
  func.func @_repeat2_kernel(%arg0: i32, %arg1: memref<1x128xf32, #tpu.memory_space<vmem>>, %arg2: memref<2x1x128xf32, #tpu.memory_space<vmem>>) attributes {dimension_semantics = [#tpu.dimension_semantics<parallel>], iteration_bounds = array<i64: 1>, scalar_prefetch = 0 : i64, scratch_operands = 0 : i64, tpu.core_type = #tpu.core_type<tc>, window_params = [{transform_indices = @transform_0, window_bounds = array<i64: 1, 128>}, {transform_indices = @transform_1, window_bounds = array<i64: 2, 1, 128>}]} {
    %c0 = arith.constant 0 : index
    %c0_0 = arith.constant 0 : index
    %0 = vector.load %arg1[%c0, %c0_0] : memref<1x128xf32, #tpu.memory_space<vmem>>, vector<1x128xf32>
    %c0_1 = arith.constant 0 : index
    %c0_2 = arith.constant 0 : index
    %c0_3 = arith.constant 0 : index
    %1 = vector.load %arg2[%c0_1, %c0_2, %c0_3] : memref<2x1x128xf32, #tpu.memory_space<vmem>>, vector<1x1x128xf32>
    %2 = vector.shape_cast %1 : vector<1x1x128xf32> to vector<1x128xf32>
    %3 = vector.shape_cast %0 : vector<1x128xf32> to vector<1x1x128xf32>
    tpu.vector_store %arg2[%c0_1, %c0_2, %c0_3], %3 {strides = array<i32>} : memref<2x1x128xf32, #tpu.memory_space<vmem>>, vector<1x1x128xf32>,
    %c1 = arith.constant 1 : index
    %c0_4 = arith.constant 0 : index
    %c0_5 = arith.constant 0 : index
    %4 = vector.load %arg2[%c1, %c0_4, %c0_5] : memref<2x1x128xf32, #tpu.memory_space<vmem>>, vector<1x1x128xf32>
    %5 = vector.shape_cast %4 : vector<1x1x128xf32> to vector<1x128xf32>
    %6 = vector.shape_cast %0 : vector<1x128xf32> to vector<1x1x128xf32>
    tpu.vector_store %arg2[%c1, %c0_4, %c0_5], %6 {strides = array<i32>} : memref<2x1x128xf32, #tpu.memory_space<vmem>>, vector<1x1x128xf32>,
    return
  }
  func.func @transform_0(%arg0: i32) -> (i32, i32) {
    %c0_i32 = arith.constant 0 : i32
    %c0_i32_0 = arith.constant 0 : i32
    return %arg0, %c0_i32 : i32, i32
  }
  func.func @transform_1(%arg0: i32) -> (i32, i32, i32) {
    %c0_i32 = arith.constant 0 : i32
    %c0_i32_0 = arith.constant 0 : i32
    %c0_i32_1 = arith.constant 0 : i32
    return %c0_i32, %arg0, %c0_i32_0 : i32, i32, i32
  }
}

</mosaic_0001>

<llo_original>
// kernel: tpu_custom_call.1
$region0: #{tpu_custom_call.1}
  #allocation0 [shape = 'u32[]', space=smem, size = 0x4, offset = 0x4, fixed_abs, tag = 'smem constant byte address 0x4 - core index']
  #allocation1 [shape = 'u32[144,128]{1,0:T(1,128)}', space=vmem, size = 0x12000, scoped, tag = 'internal scratch']
  %s0 = inlined_call_operand.hbm [shape: f32[1,128], index: 0, kind: input, shape index: {}]
  %s1 = inlined_call_operand.hbm [shape: f32[2,1,128], index: 1, kind: output, shape index: {}]
  %s2 = sld [smem:[#allocation0]]
  $region18: #{tpu_custom_call.1} parent=0
    _
  %s4 = ssub.s32 1, %s2
  %s5 = scalar_select 0, %s4, %s2
  $region1: #{tpu_custom_call.1} parent=0
    #allocation2 [shape = 'u8[512]{0}', space=vmem, size = 0x400, scoped, tag = 'input window, operand 0, single buffered']
    #allocation3 [shape = 's32[1]{0}', space=sflag, size = 0x4, scoped, tag = 'scoped memory for tpu_custom_call.1']
    #allocation4 [shape = 's32[1]{0}', space=sflag, size = 0x4, scoped, tag = 'scoped memory for tpu_custom_call.1']
    #allocation5 [shape = 'u8[1024]{0}', space=vmem, size = 0x400, scoped, tag = 'output window, operand 0, single buffered']
    %6 = vsyncpa [#allocation3], 0
    %7 = vsyncpa [#allocation4], 0
    // Predicated region
    $region2: #{tpu_custom_call.1} parent=1 // pred_check
      _
    $region3: #{tpu_custom_call.1} parent=1 // pred_check_branch
      %9 = sbr.rel (0) target = $region5
    $region4: #{tpu_custom_call.1} parent=1 // pred_region
      %s11 = ssub.s32 16, 16
      %12 = vsyncadd [#allocation3], %s11
      %s14 = sshll.u32 [#allocation2], 4
      %s15 = int_to_ptr.vmem [resolvable:$true] %s14
      %17 = dma.hbm_to_vmem [thread:$0]  %s0, 16, %s15, [#allocation3]
    $region5: #{tpu_custom_call.1} parent=1 // pred_fallthru
      _
    // Predicated region
    $region6: #{tpu_custom_call.1} parent=1 // pred_check
      _
    $region7: #{tpu_custom_call.1} parent=1 // pred_check_branch
      %19 = sbr.rel (0) target = $region9
    $region8: #{tpu_custom_call.1} parent=1 // pred_region
      %20 = dma.done [#allocation3], 16
    $region9: #{tpu_custom_call.1} parent=1 // pred_fallthru
      _
    %v21 = vld [vmem:[#allocation2] sm:$0x1]
    %22 = vst [vmem:[#allocation5] sm:$0x1] %v21
    %s23 = scalar_lea.vmem [#allocation5], 1
    %24 = vst [vmem:[%s23] sm:$0x1] %v21
    // Predicated region
    $region10: #{tpu_custom_call.1} parent=1 // pred_check
      _
    $region11: #{tpu_custom_call.1} parent=1 // pred_check_branch
      %26 = sbr.rel (0) target = $region13
    $region12: #{tpu_custom_call.1} parent=1 // pred_region
      %s28 = ssub.s32 32, 32
      %29 = vsyncadd [#allocation4], %s28
      %s30 = sshll.u32 [#allocation5], 4
      %s31 = int_to_ptr.vmem [resolvable:$true] %s30
      %36 = dma.vmem_to_hbm [thread:$0]  %s31, 32, %s1, [#allocation4], 16, 16, 1
    $region13: #{tpu_custom_call.1} parent=1 // pred_fallthru
      _
    // Predicated region
    $region14: #{tpu_custom_call.1} parent=1 // pred_check
      _
    $region15: #{tpu_custom_call.1} parent=1 // pred_check_branch
      %38 = sbr.rel (0) target = $region17
    $region16: #{tpu_custom_call.1} parent=1 // pred_region
      %39 = dma.done [#allocation4], 32
    $region17: #{tpu_custom_call.1} parent=1 // pred_fallthru
      _
    %40 = vsyncpa [#allocation3], 1
    %41 = vsyncpa [#allocation4], 1

</llo_original>
